<compile_context>
chip_gen: v7x
topology: tpu7x:2x2x1
jax: 0.10.0
libtpu: 0.0.40
codegen_flags: <defaults>
</compile_context>

<pallas_src>
import functools

import jax
import jax.numpy as jnp
from jax.experimental import pallas as pl
from jax.experimental.pallas import tpu as pltpu


def _layernorm2d_kernel(x_ref, w_ref, b_ref, o_ref, *, eps, inv_c):
    # x_ref: (1, C, T)   w_ref/b_ref: (C, 1)   o_ref: (1, C, T)
    x = x_ref[...].astype(jnp.float32)
    # Two-pass channel statistics (sublane reductions on the VPU/XLU; MXU is
    # left idle on purpose -- the kernel is HBM-bound, VALU has slack).
    mean = jnp.sum(x, axis=1, keepdims=True) * inv_c                 # (1, 1, T)
    centered = x - mean
    var = jnp.sum(centered * centered, axis=1, keepdims=True) * inv_c
    y = centered * jax.lax.rsqrt(var + eps)                          # EUP rsqrt
    w = w_ref[...].astype(jnp.float32)                               # (C, 1) -> broadcasts over lanes
    b = b_ref[...].astype(jnp.float32)
    o_ref[...] = (w * y + b).astype(o_ref.dtype)


def _round_up(x, m):
    return ((x + m - 1) // m) * m


def _choose_tile_hw(hw, c, itemsize, n):
    """Pick the lane-tile width (multiple of 128).

    Target ~2 MiB of input per tile (memory-bound kernel; 512+ lanes already
    reach ~85% of HBM roofline).  Then shrink, if needed, so the grid has at
    least ~8 steps for v7x megacore sharding.
    """
    target_bytes = 2 * 1024 * 1024
    tile = target_bytes // max(c * itemsize, 1)
    tile = max(128, (tile // 128) * 128)
    tile = min(tile, 2048)
    # No point making the tile wider than the (lane-padded) spatial extent.
    tile = min(tile, _round_up(hw, 128))
    # v7x megacore: keep enough grid steps for 2 TensorCores to share.
    while tile > 128 and n * ((hw + tile - 1) // tile) < 8:
        tile = max(128, ((tile // 2) // 128) * 128)
    return tile


def layernorm2d(x, weight, bias, *, eps=1e-6):
    """x: (N, C, H, W)  weight/bias: (C,) -> (N, C, H, W); matches PyTorch LayerNorm2d."""
    N, C, H, W = x.shape
    HW = H * W
    itemsize = jnp.dtype(x.dtype).itemsize

    # (N, C, H, W) -> (N, C, H*W): layout-preserving, no data movement.
    x3 = x.reshape(N, C, HW)

    tile_hw = _choose_tile_hw(HW, C, itemsize, N)
    # Ragged last block (HW % tile_hw != 0) is masked by Pallas -- no pad/slice.
    grid = (N, pl.cdiv(HW, tile_hw))

    # NOTE: for C < 8 the sublane dim is padded to 8 in each vreg/DMA row;
    # still HBM-bound so left as-is (fold tiles into sublanes only if small-C
    # shapes matter in production).
    w2d = weight.reshape(C, 1)
    b2d = bias.reshape(C, 1)

    out3 = pl.pallas_call(
        functools.partial(_layernorm2d_kernel, eps=eps, inv_c=1.0 / C),
        out_shape=jax.ShapeDtypeStruct((N, C, HW), x.dtype),
        grid=grid,
        in_specs=[
            pl.BlockSpec((1, C, tile_hw), lambda n, p: (n, 0, p)),  # pixel tile
            pl.BlockSpec((C, 1), lambda n, p: (0, 0)),              # weight (replicated)
            pl.BlockSpec((C, 1), lambda n, p: (0, 0)),              # bias   (replicated)
        ],
        out_specs=pl.BlockSpec((1, C, tile_hw), lambda n, p: (n, 0, p)),
        compiler_params=pltpu.CompilerParams(
            dimension_semantics=("parallel", "parallel"),
            # Small fixed tiles => worst-case footprint well under 48 MiB:
            # fits v7x's 64 MiB/TC physical VMEM and lifts v5e's 16 MiB
            # scoped default.
            vmem_limit_bytes=48 * 1024 * 1024,
        ),
    )(x3, w2d, b2d)

    return out3.reshape(N, C, H, W)


def layernorm2d_ref(x, weight, bias, eps=1e-6):
    """Pure-JAX reference mirroring the PyTorch forward exactly."""
    u = jnp.mean(x, axis=1, keepdims=True)
    s = jnp.mean((x - u) ** 2, axis=1, keepdims=True)
    xn = (x - u) / jnp.sqrt(s + eps)
    return weight[None, :, None, None] * xn + bias[None, :, None, None]


if __name__ == "__main__":
    key = jax.random.PRNGKey(0)
    N, C, H, W = 2, 4, 16, 16
    x = jax.random.normal(key, (N, C, H, W), dtype=jnp.float32)

    # Deterministic parameter init, matching nn.Parameter(torch.ones/zeros(C)).
    weight = jnp.ones((C,), dtype=jnp.float32)
    bias = jnp.zeros((C,), dtype=jnp.float32)

    out = layernorm2d(x, weight, bias, eps=1e-6)
    out = jax.block_until_ready(out)

    ref = layernorm2d_ref(x, weight, bias, eps=1e-6)
    assert out.shape == (N, C, H, W)
    assert jnp.allclose(out, ref, atol=1e-5, rtol=1e-5)

    print("KERNEL_OK")
</pallas_src>

<mosaic_0001>
module attributes {stable_mosaic.version = 11 : i64} {
  func.func @_layernorm2d_kernel(%arg0: i32, %arg1: i32, %arg2: memref<1x4x128xf32, #tpu.memory_space<vmem>>, %arg3: memref<4x1xf32, #tpu.memory_space<vmem>>, %arg4: memref<4x1xf32, #tpu.memory_space<vmem>>, %arg5: memref<1x4x128xf32, #tpu.memory_space<vmem>>) attributes {dimension_semantics = [#tpu.dimension_semantics<parallel>, #tpu.dimension_semantics<parallel>], iteration_bounds = array<i64: 2, 2>, scalar_prefetch = 0 : i64, scratch_operands = 0 : i64, tpu.core_type = #tpu.core_type<tc>, window_params = [{transform_indices = @transform_0, window_bounds = array<i64: 1, 4, 128>}, {pipeline_mode = #tpu.pipeline_mode<synchronous>, transform_indices = @transform_1, window_bounds = array<i64: 4, 1>}, {pipeline_mode = #tpu.pipeline_mode<synchronous>, transform_indices = @transform_2, window_bounds = array<i64: 4, 1>}, {transform_indices = @transform_3, window_bounds = array<i64: 1, 4, 128>}]} {
    %c0 = arith.constant 0 : index
    %c0_0 = arith.constant 0 : index
    %c0_1 = arith.constant 0 : index
    %0 = vector.load %arg2[%c0, %c0_0, %c0_1] : memref<1x4x128xf32, #tpu.memory_space<vmem>>, vector<1x4x128xf32>
    %cst = arith.constant dense<0.000000e+00> : vector<1x128xf32>
    %1 = vector.multi_reduction <add>, %0, %cst [1] : vector<1x4x128xf32> to vector<1x128xf32>
    %2 = vector.shape_cast %1 : vector<1x128xf32> to vector<1x1x128xf32>
    %cst_2 = arith.constant 2.500000e-01 : f32
    %3 = vector.broadcast %cst_2 : f32 to vector<1x1x128xf32>
    %4 = arith.mulf %2, %3 : vector<1x1x128xf32>
    %5 = vector.broadcast %4 : vector<1x1x128xf32> to vector<1x4x128xf32>
    %6 = arith.subf %0, %5 : vector<1x4x128xf32>
    %7 = arith.mulf %6, %6 : vector<1x4x128xf32>
    %cst_3 = arith.constant dense<0.000000e+00> : vector<1x128xf32>
    %8 = vector.multi_reduction <add>, %7, %cst_3 [1] : vector<1x4x128xf32> to vector<1x128xf32>
    %9 = vector.shape_cast %8 : vector<1x128xf32> to vector<1x1x128xf32>
    %cst_4 = arith.constant 2.500000e-01 : f32
    %10 = vector.broadcast %cst_4 : f32 to vector<1x1x128xf32>
    %11 = arith.mulf %9, %10 : vector<1x1x128xf32>
    %cst_5 = arith.constant 9.99999997E-7 : f32
    %12 = vector.broadcast %cst_5 : f32 to vector<1x1x128xf32>
    %13 = arith.addf %11, %12 : vector<1x1x128xf32>
    %14 = math.rsqrt %13 : vector<1x1x128xf32>
    %15 = vector.broadcast %14 : vector<1x1x128xf32> to vector<1x4x128xf32>
    %16 = arith.mulf %6, %15 : vector<1x4x128xf32>
    %c0_6 = arith.constant 0 : index
    %c0_7 = arith.constant 0 : index
    %17 = vector.load %arg3[%c0_6, %c0_7] : memref<4x1xf32, #tpu.memory_space<vmem>>, vector<4x1xf32>
    %c0_8 = arith.constant 0 : index
    %c0_9 = arith.constant 0 : index
    %18 = vector.load %arg4[%c0_8, %c0_9] : memref<4x1xf32, #tpu.memory_space<vmem>>, vector<4x1xf32>
    %19 = vector.shape_cast %17 : vector<4x1xf32> to vector<1x4x1xf32>
    %20 = vector.broadcast %19 : vector<1x4x1xf32> to vector<1x4x128xf32>
    %21 = arith.mulf %20, %16 : vector<1x4x128xf32>
    %22 = vector.shape_cast %18 : vector<4x1xf32> to vector<1x4x1xf32>
    %23 = vector.broadcast %22 : vector<1x4x1xf32> to vector<1x4x128xf32>
    %24 = arith.addf %21, %23 : vector<1x4x128xf32>
    %c0_10 = arith.constant 0 : index
    %c0_11 = arith.constant 0 : index
    %c0_12 = arith.constant 0 : index
    %25 = vector.load %arg5[%c0_10, %c0_11, %c0_12] : memref<1x4x128xf32, #tpu.memory_space<vmem>>, vector<1x4x128xf32>
    tpu.vector_store %arg5[%c0_10, %c0_11, %c0_12], %24 {strides = array<i32>} : memref<1x4x128xf32, #tpu.memory_space<vmem>>, vector<1x4x128xf32>,
    return
  }
  func.func @transform_0(%arg0: i32, %arg1: i32) -> (i32, i32, i32) {
    %c0_i32 = arith.constant 0 : i32
    %c0_i32_0 = arith.constant 0 : i32
    return %arg0, %c0_i32, %arg1 : i32, i32, i32
  }
  func.func @transform_1(%arg0: i32, %arg1: i32) -> (i32, i32) {
    %c0_i32 = arith.constant 0 : i32
    %c0_i32_0 = arith.constant 0 : i32
    %c0_i32_1 = arith.constant 0 : i32
    return %c0_i32, %c0_i32_0 : i32, i32
  }
  func.func @transform_2(%arg0: i32, %arg1: i32) -> (i32, i32) {
    %c0_i32 = arith.constant 0 : i32
    %c0_i32_0 = arith.constant 0 : i32
    %c0_i32_1 = arith.constant 0 : i32
    return %c0_i32, %c0_i32_0 : i32, i32
  }
  func.func @transform_3(%arg0: i32, %arg1: i32) -> (i32, i32, i32) {
    %c0_i32 = arith.constant 0 : i32
    %c0_i32_0 = arith.constant 0 : i32
    return %arg0, %c0_i32, %arg1 : i32, i32, i32
  }
}

</mosaic_0001>

<llo_original>
// kernel: tpu_custom_call.1
$region0: #{tpu_custom_call.1}
  #allocation0 [shape = 'u32[]', space=smem, size = 0x4, offset = 0x4, fixed_abs, tag = 'smem constant byte address 0x4 - core index']
  #allocation1 [shape = 'u32[144,128]{1,0:T(1,128)}', space=vmem, size = 0x12000, scoped, tag = 'internal scratch']
  %s0 = inlined_call_operand.hbm [shape: f32[2,4,256], index: 0, kind: input, shape index: {}]
  %s1 = inlined_call_operand.vmem [shape: f32[4,1], index: 1, kind: input, shape index: {}]
  %s2 = inlined_call_operand.vmem [shape: f32[4,1], index: 2, kind: input, shape index: {}]
  %s3 = inlined_call_operand.hbm [shape: f32[2,4,256], index: 3, kind: output, shape index: {}]
  %s4 = sld [smem:[#allocation0]]
  $region49: #{tpu_custom_call.1} parent=0
    _
  %s6 = ssub.s32 1, %s4
  %s7 = scalar_select 0, %s6, %s4
  $region1: #{tpu_custom_call.1} parent=0
    #allocation2 [shape = 'u8[4096]{0}', space=vmem, size = 0x1000, scoped, tag = 'input window, operand 0']
    #allocation3 [shape = 's32[2]{0}', space=sflag, size = 0x8, scoped, tag = 'scoped memory for tpu_custom_call.1']
    #allocation4 [shape = 's32[2]{0}', space=sflag, size = 0x8, scoped, tag = 'scoped memory for tpu_custom_call.1']
    #allocation5 [shape = 'u8[4096]{0}', space=vmem, size = 0x1000, scoped, tag = 'output window, operand 0']
    %8 = vsyncpa [#allocation3], 0
    %s9 = scalar_lea.sflag [#allocation3], 1
    %10 = vsyncpa %s9, 0
    %11 = vsyncpa [#allocation4], 0
    %s12 = scalar_lea.sflag [#allocation4], 1
    %13 = vsyncpa %s12, 0
    loop: start=0, step=1, limit=6
    $region2: #{tpu_custom_call.1} parent=1 // loop_pre_header
      _
    $region3: #{tpu_custom_call.1} parent=1 // loop_header
      %s15 = sphi 0, %s19
      %p16 = scmp.ge.s32.totalorder %s15, 6
      %s22 = sphi 0, %s34
      %s23 = sphi 0, %s30
      %s24 = sphi 0, %s22
      %s25 = sphi 0, %s23
      %s26 = sphi 0, %s24
      %s27 = sphi 0, %s25
      %s39 = sphi 0, %s41
      %s42 = sphi 0, %s39
      %s43 = sphi 0, %s42
      %s59 = sphi 0, %s43
      %s63 = sphi 0, %s63
      %s65 = sphi 0, %s63
      %s66 = sphi 0, %s65
      %s80 = sphi 0, %s66
      %s84 = sphi 0, %s84
      %s86 = sphi 0, %s84
      %s87 = sphi 0, %s86
      %s101 = sphi 0, %s87
      %s109 = sphi 0, %s111
      %s112 = sphi 0, %s109
      %s113 = sphi 0, %s112
      %s129 = sphi 0, %s113
    $region4: #{tpu_custom_call.1} parent=1 // loop_header_branch
      %18 = sbr.rel (%p16) target = $region8
    $region5: #{tpu_custom_call.1} parent=1 // loop_body
      %s20 = ssub.s32 %s15, 1
      %s21 = ssub.s32 %s15, 2
      %s28 = sadd.s32 1, %s23
      %p29 = scmp.ge.s32.totalorder %s28, 2
      %s30 = scalar_select %p29, 0, %s28
      %s31 = sadd.s32 1, %s22
      %s32 = scalar_select %p29, %s31, %s22
      %p33 = scmp.ge.s32.totalorder %s32, 2
      %s34 = scalar_select %p33, 0, %s32
      %s35 = ssub.s32 %s22, %s34
      %s36 = ssub.s32 %s23, %s30
      %s37 = sor.u32 %s35, %s36
      %p38 = scmp.eq.s32.totalorder %s37, 0
      %s40 = sadd.s32 %s39, 1
      %s41 = scalar_select %p38, %s39, %s40
      %p44 = pneg %p38
      %p45 = scmp.eq.s32.totalorder %s15, 3
      %p46 = por %p44, %p45
      %p47 = scmp.ne.s32.totalorder %s39, %s42
      %p48 = scmp.eq.s32.totalorder %s15, 0
      %p49 = por %p47, %p48
      %p50 = scmp.ne.s32.totalorder %s39, %s42
      %p51 = scmp.eq.s32.totalorder %s20, 3
      %p52 = por %p50, %p51
      %p53 = scmp.ne.s32.totalorder %s42, %s43
      %p54 = scmp.eq.s32.totalorder %s20, 0
      %p55 = por %p53, %p54
      %p56 = scmp.ne.s32.totalorder %s42, %s43
      %p57 = scmp.eq.s32.totalorder %s21, 3
      %p58 = por %p56, %p57
      %p60 = scmp.ne.s32.totalorder %s43, %s59
      %p61 = scmp.eq.s32.totalorder %s21, 0
      %p62 = por %p60, %p61
      %s64 = sadd.s32 %s63, 1
      %p67 = scmp.eq.s32.totalorder %s15, 3
      %p68 = scmp.ne.s32.totalorder %s63, %s65
      %p69 = scmp.eq.s32.totalorder %s15, 0
      %p70 = por %p68, %p69
      %p71 = scmp.ne.s32.totalorder %s63, %s65
      %p72 = scmp.eq.s32.totalorder %s20, 3
      %p73 = por %p71, %p72
      %p74 = scmp.ne.s32.totalorder %s65, %s66
      %p75 = scmp.eq.s32.totalorder %s20, 0
      %p76 = por %p74, %p75
      %p77 = scmp.ne.s32.totalorder %s65, %s66
      %p78 = scmp.eq.s32.totalorder %s21, 3
      %p79 = por %p77, %p78
      %p81 = scmp.ne.s32.totalorder %s66, %s80
      %p82 = scmp.eq.s32.totalorder %s21, 0
      %p83 = por %p81, %p82
      %s85 = sadd.s32 %s84, 1
      %p88 = scmp.eq.s32.totalorder %s15, 3
      %p89 = scmp.ne.s32.totalorder %s84, %s86
      %p90 = scmp.eq.s32.totalorder %s15, 0
      %p91 = por %p89, %p90
      %p92 = scmp.ne.s32.totalorder %s84, %s86
      %p93 = scmp.eq.s32.totalorder %s20, 3
      %p94 = por %p92, %p93
      %p95 = scmp.ne.s32.totalorder %s86, %s87
      %p96 = scmp.eq.s32.totalorder %s20, 0
      %p97 = por %p95, %p96
      %p98 = scmp.ne.s32.totalorder %s86, %s87
      %p99 = scmp.eq.s32.totalorder %s21, 3
      %p100 = por %p98, %p99
      %p102 = scmp.ne.s32.totalorder %s87, %s101
      %p103 = scmp.eq.s32.totalorder %s21, 0
      %p104 = por %p102, %p103
      %s105 = ssub.s32 %s22, %s34
      %s106 = ssub.s32 %s23, %s30
      %s107 = sor.u32 %s105, %s106
      %p108 = scmp.eq.s32.totalorder %s107, 0
      %s110 = sadd.s32 %s109, 1
      %s111 = scalar_select %p108, %s109, %s110
      %p114 = pneg %p108
      %p115 = scmp.eq.s32.totalorder %s15, 3
      %p116 = por %p114, %p115
      %p117 = scmp.ne.s32.totalorder %s109, %s112
      %p118 = scmp.eq.s32.totalorder %s15, 0
      %p119 = por %p117, %p118
      %p120 = scmp.ne.s32.totalorder %s109, %s112
      %p121 = scmp.eq.s32.totalorder %s20, 3
      %p122 = por %p120, %p121
      %p123 = scmp.ne.s32.totalorder %s112, %s113
      %p124 = scmp.eq.s32.totalorder %s20, 0
      %p125 = por %p123, %p124
      %p126 = scmp.ne.s32.totalorder %s112, %s113
      %p127 = scmp.eq.s32.totalorder %s21, 3
      %p128 = por %p126, %p127
      %p130 = scmp.ne.s32.totalorder %s113, %s129
      %p131 = scmp.eq.s32.totalorder %s21, 0
      %p132 = por %p130, %p131
      %p133 = scmp.le.s32.totalorder 1, %s15
      %p134 = scmp.lt.s32.totalorder %s15, 5
      %p135 = pnand %p133, %p134
      %p136 = pneg %p135
      // Predicated region
      $region9: #{tpu_custom_call.1} parent=5 // pred_check
        _
      $region10: #{tpu_custom_call.1} parent=5 // pred_check_branch
        %138 = sbr.rel (%p135) target = $region12
      $region11: #{tpu_custom_call.1} parent=5 // pred_region
        %s139 = ssub.s32 %s15, 1
        // Predicated region
        $region13: #{tpu_custom_call.1} parent=11 // pred_check
          %p140 = pneg %p76
        $region14: #{tpu_custom_call.1} parent=11 // pred_check_branch
          %142 = sbr.rel (%p140) target = $region16
        $region15: #{tpu_custom_call.1} parent=11 // pred_region
          _
        $region16: #{tpu_custom_call.1} parent=11 // pred_fallthru
          _
        // Predicated region
        $region17: #{tpu_custom_call.1} parent=11 // pred_check
          %p143 = pneg %p97
        $region18: #{tpu_custom_call.1} parent=11 // pred_check_branch
          %145 = sbr.rel (%p143) target = $region20
        $region19: #{tpu_custom_call.1} parent=11 // pred_region
          _
        $region20: #{tpu_custom_call.1} parent=11 // pred_fallthru
          _
      $region12: #{tpu_custom_call.1} parent=5 // pred_fallthru
        _
      %p146 = scmp.lt.s32.totalorder %s15, 4
      // Predicated region
      $region21: #{tpu_custom_call.1} parent=5 // pred_check
        %p147 = pneg %p146
      $region22: #{tpu_custom_call.1} parent=5 // pred_check_branch
        %149 = sbr.rel (%p147) target = $region24
      $region23: #{tpu_custom_call.1} parent=5 // pred_region
        // Predicated region
        $region25: #{tpu_custom_call.1} parent=23 // pred_check
          %p150 = pneg %p49
        $region26: #{tpu_custom_call.1} parent=23 // pred_check_branch
          %152 = sbr.rel (%p150) target = $region28
        $region27: #{tpu_custom_call.1} parent=23 // pred_region
          %s153 = sand.u32 %s39, 1
          %s154 = scalar_lea.sflag [#allocation3], %s153
          %s155 = sand.u32 %s39, 1
          %s156 = smul.addr %s155, 4
          %s157 = scalar_lea.vmem [#allocation2], %s156
          %s159 = ssub.s32 64, 64
          %160 = vsyncadd %s154, %s159
          %s161 = smul.addr %s22, 2
          %s162 = sadd.s32 %s23, %s161
          %s163 = smul.addr %s162, 64
          %s164 = scalar_lea.hbm %s0, %s163
          %s166 = sshll.u32 %s157, 4
          %s167 = int_to_ptr.vmem [resolvable:$true] %s166
          %169 = dma.hbm_to_vmem [thread:$0]  %s164, 64, %s167, %s154
        $region28: #{tpu_custom_call.1} parent=23 // pred_fallthru
          _
      $region24: #{tpu_custom_call.1} parent=5 // pred_fallthru
        _
      %p170 = scmp.le.s32.totalorder 1, %s15
      %p171 = scmp.lt.s32.totalorder %s15, 5
      %p172 = pnand %p170, %p171
      %p173 = pneg %p172
      // Predicated region
      $region29: #{tpu_custom_call.1} parent=5 // pred_check
        _
      $region30: #{tpu_custom_call.1} parent=5 // pred_check_branch
        %175 = sbr.rel (%p172) target = $region32
      $region31: #{tpu_custom_call.1} parent=5 // pred_region
        %s176 = ssub.s32 %s15, 1
        %s177 = sand.u32 %s42, 1
        %s178 = scalar_lea.sflag [#allocation3], %s177
        %s179 = sand.u32 %s42, 1
        %s180 = smul.addr %s179, 4
        %s181 = scalar_lea.vmem [#allocation2], %s180
        // Predicated region
        $region33: #{tpu_custom_call.1} parent=31 // pred_check
          %p182 = pneg %p55
        $region34: #{tpu_custom_call.1} parent=31 // pred_check_branch
          %184 = sbr.rel (%p182) target = $region36
        $region35: #{tpu_custom_call.1} parent=31 // pred_region
          %185 = dma.done %s178, 64
        $region36: #{tpu_custom_call.1} parent=31 // pred_fallthru
          _
        %s186 = sand.u32 %s42, 1
        %s187 = scalar_lea.sflag [#allocation3], %s186
        %s188 = sand.u32 %s42, 1
        %s189 = smul.addr %s188, 4
        %s190 = scalar_lea.vmem [#allocation2], %s189
        %p191 = pneg %p55
        %p192 = pneg %p52
        %p193 = pneg %p76
        %p194 = pneg %p73
        %p195 = pneg %p97
        %p196 = pneg %p94
        %p197 = pneg %p125
        %p198 = pneg %p122
        %s199 = sand.u32 %s112, 1
        %s200 = scalar_lea.sflag [#allocation4], %s199
        %s201 = sand.u32 %s112, 1
        %s202 = smul.addr %s201, 4
        %s203 = scalar_lea.vmem [#allocation5], %s202
        %v204 = vld [vmem:[%s181] sm:$0xf]
        %vm205 = vcmask 1043456
        %v206 = vsel %vm205, %v204, 0.0
        %v207 = vrot.slane %v206, 4
        %v208 = vadd.f32 %v206, %v207
        %v209 = vrot.slane %v208, 2
        %v210 = vadd.f32 %v208, %v209
        %v211 = vrot.slane %v210, 1
        %v212 = vadd.f32 %v210, %v211
        %v213 = vmul.f32 %v212, 0.25
        %v214 = vsub.f32 %v204, %v213
        %v215 = vmul.f32 %v214, %v214
        %v216 = vsel %vm205, %v215, 0.0
        %v217 = vrot.slane %v216, 4
        %v218 = vadd.f32 %v216, %v217
        %v219 = vrot.slane %v218, 2
        %v220 = vadd.f32 %v218, %v219
        %v221 = vrot.slane %v220, 1
        %v222 = vadd.f32 %v220, %v221
        %v223 = vmul.f32 %v222, 0.25
        %v224 = vadd.f32 %v223, 1e-06
        %v225 = vrsqrt.pop %v224
        %v226 = vmul.f32 %v214, %v225
        %v227 = vld [vmem:[%s1] sm:$0xf]
        %v228 = vld [vmem:[%s2] sm:$0xf]
        %230 = vset.pattern.permute.xlu0 0
        %231 = vperm.xlu0 %230, %v227
        %v232 = vpop.permute.xlu0 %231
        %v234 = vmul.f32 %v232, %v226
        %236 = vset.pattern.permute.xlu0 0
        %237 = vperm.xlu0 %236, %v228
        %v238 = vpop.permute.xlu0 %237
        %v240 = vadd.f32 %v234, %v238
        %241 = vst [vmem:[%s203] sm:$0xf] %v240
        %s242 = sand.u32 %s112, 1
        %s243 = scalar_lea.sflag [#allocation4], %s242
        %s244 = sand.u32 %s112, 1
        %s245 = smul.addr %s244, 4
        %s246 = scalar_lea.vmem [#allocation5], %s245
        // Predicated region
        $region37: #{tpu_custom_call.1} parent=31 // pred_check
          %p247 = pneg %p122
        $region38: #{tpu_custom_call.1} parent=31 // pred_check_branch
          %249 = sbr.rel (%p247) target = $region40
        $region39: #{tpu_custom_call.1} parent=31 // pred_region
          %s251 = ssub.s32 64, 64
          %252 = vsyncadd %s243, %s251
          %s253 = smul.addr %s24, 2
          %s254 = sadd.s32 %s25, %s253
          %s255 = smul.addr %s254, 64
          %s256 = scalar_lea.hbm %s3, %s255
          %s258 = sshll.u32 %s246, 4
          %s259 = int_to_ptr.vmem [resolvable:$true] %s258
          %261 = dma.vmem_to_hbm [thread:$0]  %s259, 64, %s256, %s243
        $region40: #{tpu_custom_call.1} parent=31 // pred_fallthru
          _
      $region32: #{tpu_custom_call.1} parent=5 // pred_fallthru
        _
      %p262 = scmp.le.s32.totalorder 2, %s15
      // Predicated region
      $region41: #{tpu_custom_call.1} parent=5 // pred_check
        %p263 = pneg %p262
      $region42: #{tpu_custom_call.1} parent=5 // pred_check_branch
        %265 = sbr.rel (%p263) target = $region44
      $region43: #{tpu_custom_call.1} parent=5 // pred_region
        %s266 = ssub.s32 %s15, 2
        // Predicated region
        $region45: #{tpu_custom_call.1} parent=43 // pred_check
          %p267 = pneg %p128
        $region46: #{tpu_custom_call.1} parent=43 // pred_check_branch
          %269 = sbr.rel (%p267) target = $region48
        $region47: #{tpu_custom_call.1} parent=43 // pred_region
          %s270 = sand.u32 %s113, 1
          %s271 = scalar_lea.sflag [#allocation4], %s270
          %s272 = sand.u32 %s113, 1
          %s273 = smul.addr %s272, 4
          %s274 = scalar_lea.vmem [#allocation5], %s273
          %275 = dma.done %s271, 64
        $region48: #{tpu_custom_call.1} parent=43 // pred_fallthru
          _
      $region44: #{tpu_custom_call.1} parent=5 // pred_fallthru
        _
    $region6: #{tpu_custom_call.1} parent=1 // loop_footer
      %s19 = sadd.s32 1, %s15
    $region7: #{tpu_custom_call.1} parent=1 // loop_footer_branch
      %14 = sbr.rel target = $region3
    $region8: #{tpu_custom_call.1} parent=1 // loop_exit
      _
    %276 = vsyncpa [#allocation3], 1
    %s277 = scalar_lea.sflag [#allocation3], 1
    %278 = vsyncpa %s277, 1
    %279 = vsyncpa [#allocation4], 1
    %s280 = scalar_lea.sflag [#allocation4], 1
    %281 = vsyncpa %s280, 1

</llo_original>
